<compile_context>
chip_gen: v7x
topology: tpu7x:2x2x1
jax: 0.10.0
libtpu: 0.0.40
codegen_flags: <defaults>
</compile_context>

<pallas_src>
import functools

import jax
import jax.numpy as jnp
from jax.experimental import pallas as pl
from jax.experimental.pallas import tpu as pltpu


def _round_up(v, m):
    return (v + m - 1) // m * m


def _p2s_kernel(x_ref, w_ref, o_ref, acc_ref, rowsq_ref, colsq_ref, *,
                use_bf16_matmul):
    k = pl.program_id(2)

    @pl.when(k == 0)
    def _init():
        acc_ref[...] = jnp.zeros_like(acc_ref)
        rowsq_ref[...] = jnp.zeros_like(rowsq_ref)
        colsq_ref[...] = jnp.zeros_like(colsq_ref)

    x = x_ref[...].astype(jnp.float32)   # (tm, tk)
    w = w_ref[...].astype(jnp.float32)   # (tk, tn)

    # Norm accumulations always in f32 (review correctness note).
    rowsq_ref[...] += jnp.sum(x * x, axis=1, keepdims=True)   # (tm, 1)
    colsq_ref[...] += jnp.sum(w * w, axis=0, keepdims=True)   # (1, tn)

    if use_bf16_matmul:
        # v6e/v7x MXU path: bf16 inputs, f32 accumulation (validate ~1e-3).
        xm = x.astype(jnp.bfloat16)
        wm = w.astype(jnp.bfloat16)
    else:
        xm, wm = x, w
    acc_ref[...] += jnp.dot(xm, wm, preferred_element_type=jnp.float32)

    @pl.when(k == pl.num_programs(2) - 1)
    def _finalize():
        # renorm(2, dim=1, 1e-5).mul(1e5): columns with norm > 1e-5 get scale
        # 1/norm (unit norm); smaller columns keep scale 1e5.
        colsq = colsq_ref[...]
        col_scale = jnp.where(colsq > jnp.float32(1e-10),
                              jax.lax.rsqrt(colsq),
                              jnp.float32(1e5))                 # (1, tn)
        # NOTE: an all-zero input row gives rsqrt(0)=inf -> NaN, matching the
        # PyTorch 0/0 behavior (padded rows are sliced off by the wrapper).
        row_inv = jax.lax.rsqrt(rowsq_ref[...])                 # (tm, 1)
        cos = acc_ref[...] * col_scale * row_inv
        o_ref[...] = jnp.clip(cos, -1.0, 1.0).astype(o_ref.dtype)


def p2s_activation(x, w, *, tm=256, tn=512, tk=512, use_bf16_matmul=False):
    """cos_theta = clamp((x @ renorm(w)*1e5) / ||x||_row, -1, 1).

    x: (batch, in_planes) float32
    w: (in_planes, out_planes) float32
    """
    B, D = x.shape
    Dw, C = w.shape
    assert D == Dw

    # Shrink tiles for small problems while keeping (8, 128) alignment.
    tm = min(tm, _round_up(B, 8))
    tn = min(tn, _round_up(C, 128))
    tk = min(tk, _round_up(D, 128))
    assert tm % 8 == 0 and tn % 128 == 0 and tk % 128 == 0

    Bp = _round_up(B, tm)
    Cp = _round_up(C, tn)
    Dp = _round_up(D, tk)

    # Zero padding is exact: padded K entries contribute 0 to the matmul and
    # the norms; padded output rows/cols are sliced off below. Padding C to a
    # multiple of 128 keeps the output lane axis dense (unmasked stores).
    x_p = jnp.pad(x, ((0, Bp - B), (0, Dp - D)))
    w_p = jnp.pad(w, ((0, Dp - D), (0, Cp - C)))

    grid = (Bp // tm, Cp // tn, Dp // tk)
    kernel = functools.partial(_p2s_kernel, use_bf16_matmul=use_bf16_matmul)

    cost = pl.CostEstimate(
        flops=2 * Bp * Dp * Cp,
        transcendentals=Bp + Cp,                       # row/col rsqrt
        bytes_accessed=4 * (Bp * Dp + Dp * Cp + Bp * Cp),
    )

    out = pl.pallas_call(
        kernel,
        out_shape=jax.ShapeDtypeStruct((Bp, Cp), x.dtype),
        grid_spec=pltpu.PrefetchScalarGridSpec(
            num_scalar_prefetch=0,
            grid=grid,
            in_specs=[
                pl.BlockSpec((tm, tk), lambda i, j, k: (i, k)),
                pl.BlockSpec((tk, tn), lambda i, j, k: (k, j)),
            ],
            out_specs=pl.BlockSpec((tm, tn), lambda i, j, k: (i, j)),
            scratch_shapes=[
                pltpu.VMEM((tm, tn), jnp.float32),     # matmul accumulator
                pltpu.VMEM((tm, 1), jnp.float32),      # sum(x^2) over K
                pltpu.VMEM((1, tn), jnp.float32),      # sum(w^2) over K
            ],
        ),
        compiler_params=pltpu.CompilerParams(
            dimension_semantics=("parallel", "parallel", "arbitrary")),
        cost_estimate=cost,
    )(x_p, w_p)

    return out[:B, :C]


def _reference(x, w):
    col_norm = jnp.sqrt(jnp.sum(w * w, axis=0, keepdims=True))
    scale = jnp.where(col_norm > 1e-5, 1e-5 / col_norm, 1.0) * 1e5
    w_n = w * scale
    x_mod = jnp.sqrt(jnp.sum(x * x, axis=1, keepdims=True))
    cos = jnp.dot(x, w_n, precision=jax.lax.Precision.HIGHEST) / x_mod
    return jnp.clip(cos, -1.0, 1.0)


if __name__ == "__main__":
    batch, in_planes, out_planes = 24, 256, 10

    key = jax.random.PRNGKey(0)
    kx, kw = jax.random.split(key)

    # Same init distribution as the PyTorch module: uniform(-1, 1) weights
    # (the in-kernel renorm makes the exact init scale irrelevant).
    w = jax.random.uniform(kw, (in_planes, out_planes),
                           minval=-1.0, maxval=1.0, dtype=jnp.float32)
    x = jax.random.normal(kx, (batch, in_planes), dtype=jnp.float32)

    # Small explicit tiles -> grid (3, 1, 2): exercises the K-accumulation
    # and the parallel M axis.
    out_tiled = p2s_activation(x, w, tm=8, tn=128, tk=128)
    out_tiled = jax.block_until_ready(out_tiled)

    # Default (production-sized) tiles, auto-shrunk to the padded problem.
    out_default = p2s_activation(x, w)
    out_default = jax.block_until_ready(out_default)

    ref = _reference(x, w)
    assert out_tiled.shape == (batch, out_planes)
    assert out_default.shape == (batch, out_planes)
    assert jnp.allclose(out_tiled, ref, atol=1e-4, rtol=1e-4)
    assert jnp.allclose(out_default, ref, atol=1e-4, rtol=1e-4)

    print("KERNEL_OK")
</pallas_src>

<mosaic_0001>
module attributes {stable_mosaic.version = 11 : i64} {
  func.func @_p2s_kernel(%arg0: i32, %arg1: i32, %arg2: i32, %arg3: memref<8x128xf32, #tpu.memory_space<vmem>>, %arg4: memref<128x128xf32, #tpu.memory_space<vmem>>, %arg5: memref<8x128xf32, #tpu.memory_space<vmem>>, %arg6: memref<8x128xf32, #tpu.memory_space<vmem>>, %arg7: memref<8x1xf32, #tpu.memory_space<vmem>>, %arg8: memref<1x128xf32, #tpu.memory_space<vmem>>) attributes {dimension_semantics = [#tpu.dimension_semantics<parallel>, #tpu.dimension_semantics<parallel>, #tpu.dimension_semantics<arbitrary>], iteration_bounds = array<i64: 3, 1, 2>, scalar_prefetch = 0 : i64, scratch_operands = 3 : i64, tpu.core_type = #tpu.core_type<tc>, window_params = [{transform_indices = @transform_0, window_bounds = array<i64: 8, 128>}, {transform_indices = @transform_1, window_bounds = array<i64: 128, 128>}, {transform_indices = @transform_2, window_bounds = array<i64: 8, 128>}]} {
    %c0_i32 = arith.constant 0 : i32
    %0 = arith.cmpi eq, %arg2, %c0_i32 : i32
    %1 = arith.extui %0 : i1 to i32
    %c0_i32_0 = arith.constant 0 : i32
    %2 = arith.cmpi ne, %1, %c0_i32_0 : i32
    scf.if %2 {
      %cst_19 = arith.constant 0.000000e+00 : f32
      %24 = vector.broadcast %cst_19 : f32 to vector<8x128xf32>
      %c0_20 = arith.constant 0 : index
      %c0_21 = arith.constant 0 : index
      %25 = vector.load %arg6[%c0_20, %c0_21] : memref<8x128xf32, #tpu.memory_space<vmem>>, vector<8x128xf32>
      tpu.vector_store %arg6[%c0_20, %c0_21], %24 {strides = array<i32>} : memref<8x128xf32, #tpu.memory_space<vmem>>, vector<8x128xf32>,
      %cst_22 = arith.constant 0.000000e+00 : f32
      %26 = vector.broadcast %cst_22 : f32 to vector<8x1xf32>
      %c0_23 = arith.constant 0 : index
      %c0_24 = arith.constant 0 : index
      %27 = vector.load %arg7[%c0_23, %c0_24] : memref<8x1xf32, #tpu.memory_space<vmem>>, vector<8x1xf32>
      tpu.vector_store %arg7[%c0_23, %c0_24], %26 {strides = array<i32>} : memref<8x1xf32, #tpu.memory_space<vmem>>, vector<8x1xf32>,
      %cst_25 = arith.constant 0.000000e+00 : f32
      %28 = vector.broadcast %cst_25 : f32 to vector<1x128xf32>
      %c0_26 = arith.constant 0 : index
      %c0_27 = arith.constant 0 : index
      %29 = vector.load %arg8[%c0_26, %c0_27] : memref<1x128xf32, #tpu.memory_space<vmem>>, vector<1x128xf32>
      tpu.vector_store %arg8[%c0_26, %c0_27], %28 {strides = array<i32>} : memref<1x128xf32, #tpu.memory_space<vmem>>, vector<1x128xf32>,
    } else {
    }
    %c0 = arith.constant 0 : index
    %c0_1 = arith.constant 0 : index
    %3 = vector.load %arg3[%c0, %c0_1] : memref<8x128xf32, #tpu.memory_space<vmem>>, vector<8x128xf32>
    %c0_2 = arith.constant 0 : index
    %c0_3 = arith.constant 0 : index
    %4 = vector.load %arg4[%c0_2, %c0_3] : memref<128x128xf32, #tpu.memory_space<vmem>>, vector<128x128xf32>
    %c0_4 = arith.constant 0 : index
    %c0_5 = arith.constant 0 : index
    %5 = vector.load %arg7[%c0_4, %c0_5] : memref<8x1xf32, #tpu.memory_space<vmem>>, vector<8x1xf32>
    %6 = arith.mulf %3, %3 : vector<8x128xf32>
    %cst = arith.constant dense<0.000000e+00> : vector<8xf32>
    %7 = vector.multi_reduction <add>, %6, %cst [1] : vector<8x128xf32> to vector<8xf32>
    %8 = vector.shape_cast %7 : vector<8xf32> to vector<8x1xf32>
    %9 = arith.addf %5, %8 : vector<8x1xf32>
    %c0_6 = arith.constant 0 : index
    %c0_7 = arith.constant 0 : index
    %10 = vector.load %arg7[%c0_6, %c0_7] : memref<8x1xf32, #tpu.memory_space<vmem>>, vector<8x1xf32>
    tpu.vector_store %arg7[%c0_6, %c0_7], %9 {strides = array<i32>} : memref<8x1xf32, #tpu.memory_space<vmem>>, vector<8x1xf32>,
    %c0_8 = arith.constant 0 : index
    %c0_9 = arith.constant 0 : index
    %11 = vector.load %arg8[%c0_8, %c0_9] : memref<1x128xf32, #tpu.memory_space<vmem>>, vector<1x128xf32>
    %12 = arith.mulf %4, %4 : vector<128x128xf32>
    %cst_10 = arith.constant dense<0.000000e+00> : vector<128xf32>
    %13 = vector.multi_reduction <add>, %12, %cst_10 [0] : vector<128x128xf32> to vector<128xf32>
    %14 = vector.shape_cast %13 : vector<128xf32> to vector<1x128xf32>
    %15 = arith.addf %11, %14 : vector<1x128xf32>
    %c0_11 = arith.constant 0 : index
    %c0_12 = arith.constant 0 : index
    %16 = vector.load %arg8[%c0_11, %c0_12] : memref<1x128xf32, #tpu.memory_space<vmem>>, vector<1x128xf32>
    tpu.vector_store %arg8[%c0_11, %c0_12], %15 {strides = array<i32>} : memref<1x128xf32, #tpu.memory_space<vmem>>, vector<1x128xf32>,
    %c0_13 = arith.constant 0 : index
    %c0_14 = arith.constant 0 : index
    %17 = vector.load %arg6[%c0_13, %c0_14] : memref<8x128xf32, #tpu.memory_space<vmem>>, vector<8x128xf32>
    %cst_15 = arith.constant dense<0.000000e+00> : vector<8x128xf32>
    %18 = tpu.matmul %3, %4, %cst_15 {dimension_numbers = #tpu.dot_dimension_numbers<[1], [0], [0], [1], [0, 0, 1, 1], [], []>} : vector<8x128xf32>, vector<128x128xf32>, vector<8x128xf32> -> vector<8x128xf32>
    %19 = arith.addf %17, %18 : vector<8x128xf32>
    %c0_16 = arith.constant 0 : index
    %c0_17 = arith.constant 0 : index
    %20 = vector.load %arg6[%c0_16, %c0_17] : memref<8x128xf32, #tpu.memory_space<vmem>>, vector<8x128xf32>
    tpu.vector_store %arg6[%c0_16, %c0_17], %19 {strides = array<i32>} : memref<8x128xf32, #tpu.memory_space<vmem>>, vector<8x128xf32>,
    %c1_i32 = arith.constant 1 : i32
    %21 = arith.cmpi eq, %arg2, %c1_i32 : i32
    %22 = arith.extui %21 : i1 to i32
    %c0_i32_18 = arith.constant 0 : i32
    %23 = arith.cmpi ne, %22, %c0_i32_18 : i32
    scf.if %23 {
      %c0_19 = arith.constant 0 : index
      %c0_20 = arith.constant 0 : index
      %24 = vector.load %arg8[%c0_19, %c0_20] : memref<1x128xf32, #tpu.memory_space<vmem>>, vector<1x128xf32>
      %cst_21 = arith.constant 1.000000e-10 : f32
      %25 = vector.broadcast %cst_21 : f32 to vector<1x128xf32>
      %26 = arith.cmpf ogt, %24, %25 : vector<1x128xf32>
      %27 = math.rsqrt %24 : vector<1x128xf32>
      %cst_22 = arith.constant 1.000000e+05 : f32
      %28 = vector.broadcast %cst_22 : f32 to vector<1x128xf32>
      %29 = arith.select %26, %27, %28 : vector<1x128xi1>, vector<1x128xf32>
      %c0_23 = arith.constant 0 : index
      %c0_24 = arith.constant 0 : index
      %30 = vector.load %arg7[%c0_23, %c0_24] : memref<8x1xf32, #tpu.memory_space<vmem>>, vector<8x1xf32>
      %31 = math.rsqrt %30 : vector<8x1xf32>
      %c0_25 = arith.constant 0 : index
      %c0_26 = arith.constant 0 : index
      %32 = vector.load %arg6[%c0_25, %c0_26] : memref<8x128xf32, #tpu.memory_space<vmem>>, vector<8x128xf32>
      %33 = vector.broadcast %29 : vector<1x128xf32> to vector<8x128xf32>
      %34 = arith.mulf %32, %33 : vector<8x128xf32>
      %35 = vector.broadcast %31 : vector<8x1xf32> to vector<8x128xf32>
      %36 = arith.mulf %34, %35 : vector<8x128xf32>
      %cst_27 = arith.constant -1.000000e+00 : f32
      %cst_28 = arith.constant 1.000000e+00 : f32
      %37 = vector.broadcast %cst_27 : f32 to vector<8x128xf32>
      %38 = arith.maximumf %37, %36 : vector<8x128xf32>
      %39 = vector.broadcast %cst_28 : f32 to vector<8x128xf32>
      %40 = arith.minimumf %39, %38 : vector<8x128xf32>
      %c0_29 = arith.constant 0 : index
      %c0_30 = arith.constant 0 : index
      %41 = vector.load %arg5[%c0_29, %c0_30] : memref<8x128xf32, #tpu.memory_space<vmem>>, vector<8x128xf32>
      tpu.vector_store %arg5[%c0_29, %c0_30], %40 {strides = array<i32>} : memref<8x128xf32, #tpu.memory_space<vmem>>, vector<8x128xf32>,
    } else {
    }
    return
  }
  func.func @transform_0(%arg0: i32, %arg1: i32, %arg2: i32) -> (i32, i32) {
    %c0_i32 = arith.constant 0 : i32
    return %arg0, %arg2 : i32, i32
  }
  func.func @transform_1(%arg0: i32, %arg1: i32, %arg2: i32) -> (i32, i32) {
    %c0_i32 = arith.constant 0 : i32
    return %arg2, %arg1 : i32, i32
  }
  func.func @transform_2(%arg0: i32, %arg1: i32, %arg2: i32) -> (i32, i32) {
    %c0_i32 = arith.constant 0 : i32
    return %arg0, %arg1 : i32, i32
  }
}

</mosaic_0001>

<llo_original>
// kernel: tpu_custom_call.1
$region0: #{tpu_custom_call.1}
  #allocation0 [shape = 'u32[]', space=smem, size = 0x4, offset = 0x4, fixed_abs, tag = 'smem constant byte address 0x4 - core index']
  #allocation1 [shape = 'u32[144,128]{1,0:T(1,128)}', space=vmem, size = 0x12000, scoped, tag = 'internal scratch']
  #allocation2 [shape = 'f32[8,128]{1,0:T(8,128)}', space=vmem, size = 0x1000, scoped, tag = 'scratch operand']
  #allocation3 [shape = 'f32[8,1]{1,0:T(8,128)}', space=vmem, size = 0x1000, scoped, tag = 'scratch operand']
  #allocation4 [shape = 'f32[1,128]{1,0:T(1,128)}', space=vmem, size = 0x200, scoped, tag = 'scratch operand']
  %s0 = inlined_call_operand.hbm [shape: f32[24,256], index: 0, kind: input, shape index: {}]
  %s1 = inlined_call_operand.hbm [shape: f32[256,128], index: 1, kind: input, shape index: {}]
  %s2 = inlined_call_operand.hbm [shape: f32[24,128], index: 2, kind: output, shape index: {}]
  %s3 = sld [smem:[#allocation0]]
  $region57: #{tpu_custom_call.1} parent=0
    _
  %s5 = ssub.s32 1, %s3
  %s6 = scalar_select 0, %s5, %s3
  $region1: #{tpu_custom_call.1} parent=0
    #allocation5 [shape = 'u8[8192]{0}', space=vmem, size = 0x2000, scoped, tag = 'input window, operand 0']
    #allocation6 [shape = 's32[2]{0}', space=sflag, size = 0x8, scoped, tag = 'scoped memory for tpu_custom_call.1']
    #allocation7 [shape = 's32[2]{0}', space=sflag, size = 0x8, scoped, tag = 'scoped memory for tpu_custom_call.1']
    #allocation8 [shape = 'u8[131072]{0}', space=vmem, size = 0x20000, scoped, tag = 'input window, operand 1']
    #allocation9 [shape = 's32[2]{0}', space=sflag, size = 0x8, scoped, tag = 'scoped memory for tpu_custom_call.1']
    #allocation10 [shape = 'u8[8192]{0}', space=vmem, size = 0x2000, scoped, tag = 'output window, operand 0']
    %7 = vsyncpa [#allocation6], 0
    %s8 = scalar_lea.sflag [#allocation6], 1
    %9 = vsyncpa %s8, 0
    %10 = vsyncpa [#allocation9], 0
    %s11 = scalar_lea.sflag [#allocation9], 1
    %12 = vsyncpa %s11, 0
    %13 = vsyncpa [#allocation7], 0
    %s14 = scalar_lea.sflag [#allocation7], 1
    %15 = vsyncpa %s14, 0
    loop: start=0, step=1, limit=8
    $region2: #{tpu_custom_call.1} parent=1 // loop_pre_header
      _
    $region3: #{tpu_custom_call.1} parent=1 // loop_header
      %s17 = sphi 0, %s21
      %p18 = scmp.ge.s32.totalorder %s17, 8
      %s24 = sphi 0, %s43
      %s25 = sphi 0, %s39
      %s26 = sphi 0, %s35
      %s27 = sphi 0, %s24
      %s28 = sphi 0, %s25
      %s29 = sphi 0, %s26
      %s30 = sphi 0, %s27
      %s31 = sphi 0, %s28
      %s32 = sphi 0, %s29
      %s48 = sphi 0, %s50
      %s51 = sphi 0, %s48
      %s52 = sphi 0, %s51
      %s68 = sphi 0, %s52
      %s76 = sphi 0, %s78
      %s79 = sphi 0, %s76
      %s80 = sphi 0, %s79
      %s96 = sphi 0, %s80
      %s104 = sphi 0, %s106
      %s107 = sphi 0, %s104
      %s108 = sphi 0, %s107
      %s124 = sphi 0, %s108
    $region4: #{tpu_custom_call.1} parent=1 // loop_header_branch
      %20 = sbr.rel (%p18) target = $region8
    $region5: #{tpu_custom_call.1} parent=1 // loop_body
      %s22 = ssub.s32 %s17, 1
      %s23 = ssub.s32 %s17, 2
      %s33 = sadd.s32 1, %s26
      %p34 = scmp.ge.s32.totalorder %s33, 2
      %s35 = scalar_select %p34, 0, %s33
      %s36 = sadd.s32 1, %s25
      %s37 = scalar_select %p34, %s36, %s25
      %p38 = scmp.ge.s32.totalorder %s37, 1
      %s39 = scalar_select %p38, 0, %s37
      %s40 = sadd.s32 1, %s24
      %s41 = scalar_select %p38, %s40, %s24
      %p42 = scmp.ge.s32.totalorder %s41, 3
      %s43 = scalar_select %p42, 0, %s41
      %s44 = ssub.s32 %s24, %s43
      %s45 = ssub.s32 %s26, %s35
      %s46 = sor.u32 %s44, %s45
      %p47 = scmp.eq.s32.totalorder %s46, 0
      %s49 = sadd.s32 %s48, 1
      %s50 = scalar_select %p47, %s48, %s49
      %p53 = pneg %p47
      %p54 = scmp.eq.s32.totalorder %s17, 5
      %p55 = por %p53, %p54
      %p56 = scmp.ne.s32.totalorder %s48, %s51
      %p57 = scmp.eq.s32.totalorder %s17, 0
      %p58 = por %p56, %p57
      %p59 = scmp.ne.s32.totalorder %s48, %s51
      %p60 = scmp.eq.s32.totalorder %s22, 5
      %p61 = por %p59, %p60
      %p62 = scmp.ne.s32.totalorder %s51, %s52
      %p63 = scmp.eq.s32.totalorder %s22, 0
      %p64 = por %p62, %p63
      %p65 = scmp.ne.s32.totalorder %s51, %s52
      %p66 = scmp.eq.s32.totalorder %s23, 5
      %p67 = por %p65, %p66
      %p69 = scmp.ne.s32.totalorder %s52, %s68
      %p70 = scmp.eq.s32.totalorder %s23, 0
      %p71 = por %p69, %p70
      %s72 = ssub.s32 %s26, %s35
      %s73 = ssub.s32 %s25, %s39
      %s74 = sor.u32 %s72, %s73
      %p75 = scmp.eq.s32.totalorder %s74, 0
      %s77 = sadd.s32 %s76, 1
      %s78 = scalar_select %p75, %s76, %s77
      %p81 = pneg %p75
      %p82 = scmp.eq.s32.totalorder %s17, 5
      %p83 = por %p81, %p82
      %p84 = scmp.ne.s32.totalorder %s76, %s79
      %p85 = scmp.eq.s32.totalorder %s17, 0
      %p86 = por %p84, %p85
      %p87 = scmp.ne.s32.totalorder %s76, %s79
      %p88 = scmp.eq.s32.totalorder %s22, 5
      %p89 = por %p87, %p88
      %p90 = scmp.ne.s32.totalorder %s79, %s80
      %p91 = scmp.eq.s32.totalorder %s22, 0
      %p92 = por %p90, %p91
      %p93 = scmp.ne.s32.totalorder %s79, %s80
      %p94 = scmp.eq.s32.totalorder %s23, 5
      %p95 = por %p93, %p94
      %p97 = scmp.ne.s32.totalorder %s80, %s96
      %p98 = scmp.eq.s32.totalorder %s23, 0
      %p99 = por %p97, %p98
      %s100 = ssub.s32 %s24, %s43
      %s101 = ssub.s32 %s25, %s39
      %s102 = sor.u32 %s100, %s101
      %p103 = scmp.eq.s32.totalorder %s102, 0
      %s105 = sadd.s32 %s104, 1
      %s106 = scalar_select %p103, %s104, %s105
      %p109 = pneg %p103
      %p110 = scmp.eq.s32.totalorder %s17, 5
      %p111 = por %p109, %p110
      %p112 = scmp.ne.s32.totalorder %s104, %s107
      %p113 = scmp.eq.s32.totalorder %s17, 0
      %p114 = por %p112, %p113
      %p115 = scmp.ne.s32.totalorder %s104, %s107
      %p116 = scmp.eq.s32.totalorder %s22, 5
      %p117 = por %p115, %p116
      %p118 = scmp.ne.s32.totalorder %s107, %s108
      %p119 = scmp.eq.s32.totalorder %s22, 0
      %p120 = por %p118, %p119
      %p121 = scmp.ne.s32.totalorder %s107, %s108
      %p122 = scmp.eq.s32.totalorder %s23, 5
      %p123 = por %p121, %p122
      %p125 = scmp.ne.s32.totalorder %s108, %s124
      %p126 = scmp.eq.s32.totalorder %s23, 0
      %p127 = por %p125, %p126
      %p128 = scmp.le.s32.totalorder 1, %s17
      %p129 = scmp.lt.s32.totalorder %s17, 7
      %p130 = pnand %p128, %p129
      %p131 = pneg %p130
      // Predicated region
      $region9: #{tpu_custom_call.1} parent=5 // pred_check
        _
      $region10: #{tpu_custom_call.1} parent=5 // pred_check_branch
        %133 = sbr.rel (%p130) target = $region12
      $region11: #{tpu_custom_call.1} parent=5 // pred_region
        %s134 = ssub.s32 %s17, 1
      $region12: #{tpu_custom_call.1} parent=5 // pred_fallthru
        _
      %p135 = scmp.lt.s32.totalorder %s17, 6
      // Predicated region
      $region13: #{tpu_custom_call.1} parent=5 // pred_check
        %p136 = pneg %p135
      $region14: #{tpu_custom_call.1} parent=5 // pred_check_branch
        %138 = sbr.rel (%p136) target = $region16
      $region15: #{tpu_custom_call.1} parent=5 // pred_region
        // Predicated region
        $region17: #{tpu_custom_call.1} parent=15 // pred_check
          %p139 = pneg %p58
        $region18: #{tpu_custom_call.1} parent=15 // pred_check_branch
          %141 = sbr.rel (%p139) target = $region20
        $region19: #{tpu_custom_call.1} parent=15 // pred_region
          %s142 = sand.u32 %s48, 1
          %s143 = scalar_lea.sflag [#allocation6], %s142
          %s144 = sand.u32 %s48, 1
          %s145 = smul.addr %s144, 8
          %s146 = scalar_lea.vmem [#allocation5], %s145
          %s148 = ssub.s32 128, 128
          %149 = vsyncadd %s143, %s148
          %s150 = smul.addr %s24, 2
          %s151 = sadd.s32 %s26, %s150
          %s152 = smul.addr %s151, 128
          %s153 = scalar_lea.hbm %s0, %s152
          %s155 = sshll.u32 %s146, 4
          %s156 = int_to_ptr.vmem [resolvable:$true] %s155
          %158 = dma.hbm_to_vmem [thread:$0]  %s153, 128, %s156, %s143
        $region20: #{tpu_custom_call.1} parent=15 // pred_fallthru
          _
        // Predicated region
        $region21: #{tpu_custom_call.1} parent=15 // pred_check
          %p159 = pneg %p86
        $region22: #{tpu_custom_call.1} parent=15 // pred_check_branch
          %161 = sbr.rel (%p159) target = $region24
        $region23: #{tpu_custom_call.1} parent=15 // pred_region
          %s162 = sand.u32 %s76, 1
          %s163 = scalar_lea.sflag [#allocation9], %s162
          %s164 = sand.u32 %s76, 1
          %s165 = smul.addr %s164, 128
          %s166 = scalar_lea.vmem [#allocation8], %s165
          %s167 = smul.u32 16, %s26
          %s169 = ssub.s32 2048, 2048
          %170 = vsyncadd %s163, %s169
          %s171 = sadd.s32 %s25, %s167
          %s172 = smul.addr %s171, 128
          %s173 = scalar_lea.hbm %s1, %s172
          %s174 = sshll.u32 %s166, 4
          %s175 = int_to_ptr.vmem [resolvable:$true] %s174
          %180 = dma.hbm_to_vmem [thread:$0]  %s173, 2048, %s175, %s163, 128, 128, 8
        $region24: #{tpu_custom_call.1} parent=15 // pred_fallthru
          _
      $region16: #{tpu_custom_call.1} parent=5 // pred_fallthru
        _
      %p181 = scmp.le.s32.totalorder 1, %s17
      %p182 = scmp.lt.s32.totalorder %s17, 7
      %p183 = pnand %p181, %p182
      %p184 = pneg %p183
      // Predicated region
      $region25: #{tpu_custom_call.1} parent=5 // pred_check
        _
      $region26: #{tpu_custom_call.1} parent=5 // pred_check_branch
        %186 = sbr.rel (%p183) target = $region28
      $region27: #{tpu_custom_call.1} parent=5 // pred_region
        %s187 = ssub.s32 %s17, 1
        %s188 = sand.u32 %s51, 1
        %s189 = scalar_lea.sflag [#allocation6], %s188
        %s190 = sand.u32 %s51, 1
        %s191 = smul.addr %s190, 8
        %s192 = scalar_lea.vmem [#allocation5], %s191
        // Predicated region
        $region29: #{tpu_custom_call.1} parent=27 // pred_check
          %p193 = pneg %p64
        $region30: #{tpu_custom_call.1} parent=27 // pred_check_branch
          %195 = sbr.rel (%p193) target = $region32
        $region31: #{tpu_custom_call.1} parent=27 // pred_region
          %196 = dma.done %s189, 128
        $region32: #{tpu_custom_call.1} parent=27 // pred_fallthru
          _
        %s197 = sand.u32 %s79, 1
        %s198 = scalar_lea.sflag [#allocation9], %s197
        %s199 = sand.u32 %s79, 1
        %s200 = smul.addr %s199, 128
        %s201 = scalar_lea.vmem [#allocation8], %s200
        // Predicated region
        $region33: #{tpu_custom_call.1} parent=27 // pred_check
          %p202 = pneg %p92
        $region34: #{tpu_custom_call.1} parent=27 // pred_check_branch
          %204 = sbr.rel (%p202) target = $region36
        $region35: #{tpu_custom_call.1} parent=27 // pred_region
          %205 = dma.done %s198, 2048
        $region36: #{tpu_custom_call.1} parent=27 // pred_fallthru
          _
        %s206 = sand.u32 %s51, 1
        %s207 = scalar_lea.sflag [#allocation6], %s206
        %s208 = sand.u32 %s51, 1
        %s209 = smul.addr %s208, 8
        %s210 = scalar_lea.vmem [#allocation5], %s209
        %p211 = pneg %p64
        %p212 = pneg %p61
        %s213 = sand.u32 %s79, 1
        %s214 = scalar_lea.sflag [#allocation9], %s213
        %s215 = sand.u32 %s79, 1
        %s216 = smul.addr %s215, 128
        %s217 = scalar_lea.vmem [#allocation8], %s216
        %p218 = pneg %p92
        %p219 = pneg %p89
        %p220 = pneg %p120
        %p221 = pneg %p117
        %s222 = sand.u32 %s107, 1
        %s223 = scalar_lea.sflag [#allocation7], %s222
        %s224 = sand.u32 %s107, 1
        %s225 = smul.addr %s224, 8
        %s226 = scalar_lea.vmem [#allocation10], %s225
        %s227 = smul.u32 16, %s29
        %p228 = scmp.eq.s32.totalorder %s29, 0
        // Predicated region
        $region37: #{tpu_custom_call.1} parent=27 // pred_check
          %p229 = pneg %p228
        $region38: #{tpu_custom_call.1} parent=27 // pred_check_branch
          %231 = sbr.rel (%p229) target = $region40
        $region39: #{tpu_custom_call.1} parent=27 // pred_region
          %232 = vst [vmem:[#allocation2] sm:$0xff] 0.0
          %vm233 = vcmask 7168
          %234 = vst.msk [vmem:[#allocation3] sm:$0xff] %vm233, 0.0
          %235 = vst [vmem:[#allocation4] sm:$0x1] 0.0
        $region40: #{tpu_custom_call.1} parent=27 // pred_fallthru
          _
        %v236 = vld [vmem:[%s192] sm:$0xff]
        %v237 = vld [vmem:[%s201] sm:$0xff]
        %v238 = vld [vmem:[%s201 + $0x8] sm:$0xff]
        %v239 = vld [vmem:[%s201 + $0x10] sm:$0xff]
        %v240 = vld [vmem:[%s201 + $0x18] sm:$0xff]
        %v241 = vld [vmem:[%s201 + $0x20] sm:$0xff]
        %v242 = vld [vmem:[%s201 + $0x28] sm:$0xff]
        %v243 = vld [vmem:[%s201 + $0x30] sm:$0xff]
        %v244 = vld [vmem:[%s201 + $0x38] sm:$0xff]
        %v245 = vld [vmem:[%s201 + $0x40] sm:$0xff]
        %v246 = vld [vmem:[%s201 + $0x48] sm:$0xff]
        %v247 = vld [vmem:[%s201 + $0x50] sm:$0xff]
        %v248 = vld [vmem:[%s201 + $0x58] sm:$0xff]
        %v249 = vld [vmem:[%s201 + $0x60] sm:$0xff]
        %v250 = vld [vmem:[%s201 + $0x68] sm:$0xff]
        %v251 = vld [vmem:[%s201 + $0x70] sm:$0xff]
        %v252 = vld [vmem:[%s201 + $0x78] sm:$0xff]
        %v253 = vld [vmem:[#allocation3] sm:$0xff]
        %v254 = vmul.f32 %v236, %v236
        %255 = vadd.xlane.f32.xlu0 %v254
        %v256 = vpop.xlane.xlu0 %255
        %v257 = vadd.f32 %v253, %v256
        %vm258 = vcmask 7168
        %259 = vst.msk [vmem:[#allocation3] sm:$0xff] %vm258, %v257
        %v260 = vld [vmem:[#allocation4] sm:$0x1]
        %v261 = vmul.f32 %v237, %v237
        %v262 = vmul.f32 %v238, %v238
        %v263 = vmul.f32 %v239, %v239
        %v264 = vmul.f32 %v240, %v240
        %v265 = vmul.f32 %v241, %v241
        %v266 = vmul.f32 %v242, %v242
        %v267 = vmul.f32 %v243, %v243
        %v268 = vmul.f32 %v244, %v244
        %v269 = vmul.f32 %v245, %v245
        %v270 = vmul.f32 %v246, %v246
        %v271 = vmul.f32 %v247, %v247
        %v272 = vmul.f32 %v248, %v248
        %v273 = vmul.f32 %v249, %v249
        %v274 = vmul.f32 %v250, %v250
        %v275 = vmul.f32 %v251, %v251
        %v276 = vmul.f32 %v252, %v252
        %v277 = vadd.f32 %v261, %v262
        %v278 = vadd.f32 %v277, %v263
        %v279 = vadd.f32 %v278, %v264
        %v280 = vadd.f32 %v279, %v265
        %v281 = vadd.f32 %v280, %v266
        %v282 = vadd.f32 %v281, %v267
        %v283 = vadd.f32 %v282, %v268
        %v284 = vadd.f32 %v283, %v269
        %v285 = vadd.f32 %v284, %v270
        %v286 = vadd.f32 %v285, %v271
        %v287 = vadd.f32 %v286, %v272
        %v288 = vadd.f32 %v287, %v273
        %v289 = vadd.f32 %v288, %v274
        %v290 = vadd.f32 %v289, %v275
        %v291 = vadd.f32 %v290, %v276
        %v292 = vrot.slane %v291, 4
        %v293 = vadd.f32 %v291, %v292
        %v294 = vrot.slane %v293, 2
        %v295 = vadd.f32 %v293, %v294
        %v296 = vrot.slane %v295, 1
        %v297 = vadd.f32 %v295, %v296
        %v298 = vadd.f32 %v260, %v297
        %299 = vst [vmem:[#allocation4] sm:$0x1] %v298
        %v300 = vld [vmem:[#allocation2] sm:$0xff]
        %301 = vmatprep.subr.mxu0 0.0
        %302 = vmatpush1.msra.mxu0 %v237
        %303 = vmatprep.subr.mxu0 0.0
        %304 = vmatpush1.msra.mxu0 %v238
        %305 = vmatprep.subr.mxu0 0.0
        %306 = vmatpush1.msra.mxu0 %v239
        %307 = vmatprep.subr.mxu0 0.0
        %308 = vmatpush1.msra.mxu0 %v240
        %309 = vmatprep.subr.mxu0 0.0
        %310 = vmatpush1.msra.mxu0 %v241
        %311 = vmatprep.subr.mxu0 0.0
        %312 = vmatpush1.msra.mxu0 %v242
        %313 = vmatprep.subr.mxu0 0.0
        %314 = vmatpush1.msra.mxu0 %v243
        %315 = vmatprep.subr.mxu0 0.0
        %316 = vmatpush1.msra.mxu0 %v244
        %317 = vmatprep.subr.mxu0 0.0
        %318 = vmatpush1.msra.mxu0 %v245
        %319 = vmatprep.subr.mxu0 0.0
        %320 = vmatpush1.msra.mxu0 %v246
        %321 = vmatprep.subr.mxu0 0.0
        %322 = vmatpush1.msra.mxu0 %v247
        %323 = vmatprep.subr.mxu0 0.0
        %324 = vmatpush1.msra.mxu0 %v248
        %325 = vmatprep.subr.mxu0 0.0
        %326 = vmatpush1.msra.mxu0 %v249
        %327 = vmatprep.subr.mxu0 0.0
        %328 = vmatpush1.msra.mxu0 %v250
        %329 = vmatprep.subr.mxu0 0.0
        %330 = vmatpush1.msra.mxu0 %v251
        %331 = vmatprep.subr.mxu0 0.0
        %332 = vmatpush1.msra.mxu0 %v252
        %333 = vmatprep.subr.mxu0 0.0
        %334 = vmatpush1.msra.mxu0 0.0
        %335 = vmatprep.subr.mxu0 0.0
        %336 = vmatpush1.msra.mxu0 0.0
        %337 = vmatprep.subr.mxu0 0.0
        %338 = vmatpush1.msra.mxu0 0.0
        %339 = vmatprep.subr.mxu0 0.0
        %340 = vmatpush1.msra.mxu0 0.0
        %341 = vmatprep.subr.mxu0 0.0
        %342 = vmatpush1.msra.mxu0 0.0
        %343 = vmatprep.subr.mxu0 0.0
        %344 = vmatpush1.msra.mxu0 0.0
        %345 = vmatprep.subr.mxu0 0.0
        %346 = vmatpush1.msra.mxu0 0.0
        %347 = vmatprep.subr.mxu0 0.0
        %348 = vmatpush1.msra.mxu0 0.0
        %349 = vmatprep.subr.mxu0 0.0
        %350 = vmatpush1.msra.mxu0 0.0
        %351 = vmatprep.subr.mxu0 0.0
        %352 = vmatpush1.msra.mxu0 0.0
        %353 = vmatprep.subr.mxu0 0.0
        %354 = vmatpush1.msra.mxu0 0.0
        %355 = vmatprep.subr.mxu0 0.0
        %356 = vmatpush1.msra.mxu0 0.0
        %357 = vmatprep.subr.mxu0 0.0
        %358 = vmatpush1.msra.mxu0 0.0
        %359 = vmatprep.subr.mxu0 0.0
        %360 = vmatpush1.msra.mxu0 0.0
        %361 = vmatprep.subr.mxu0 0.0
        %362 = vmatpush1.msra.mxu0 0.0
        %363 = vmatprep.subr.mxu0 0.0
        %364 = vmatpush1.msra.mxu0 0.0
        %365 = vmatprep.mubr.f32.mxu0 0.0
        %366 = vmatmul.mubr.f32.gmra.mrb[0].mxu0 %v236
        %v367 = vpop.f32.mrb[0].mxu0
        %v368 = vadd.f32 0.0, %v367
        %v369 = vpop.f32.mrb[0].mxu0
        %370 = vdwg.mxu0
        %v371 = vadd.f32 %v300, %v368
        %372 = vst [vmem:[#allocation2] sm:$0xff] %v371
        %p373 = scmp.eq.s32.totalorder %s29, 1
        // Predicated region
        $region41: #{tpu_custom_call.1} parent=27 // pred_check
          %p374 = pneg %p373
        $region42: #{tpu_custom_call.1} parent=27 // pred_check_branch
          %376 = sbr.rel (%p374) target = $region44
        $region43: #{tpu_custom_call.1} parent=27 // pred_region
          %v377 = vld [vmem:[#allocation4] sm:$0x1]
          %vm378 = vcmp.gt.f32.partialorder %v377, 1e-10
          %v379 = vrsqrt.pop %v377
          %v380 = vsel %vm378, %v379, 100000.0
          %v381 = vld [vmem:[#allocation3] sm:$0xff]
          %v382 = vrsqrt.pop %v381
          %v383 = vld [vmem:[#allocation2] sm:$0xff]
          %v385 = vlaneseq
          %v386 = vshrl.u32 %v385, 7
          %v387 = vsub.s32 0, %v386
          %v388 = vrot.slane %v380, %v387
          %v390 = vmul.f32 %v383, %v388
          %392 = vset.pattern.permute.xlu0 0
          %393 = vperm.xlu0 %392, %v382
          %v394 = vpop.permute.xlu0 %393
          %v396 = vmul.f32 %v390, %v394
          %v397 = vmax.f32 %v396, -1.0
          %v398 = vmin.f32 %v397, 1.0
          %399 = vst [vmem:[%s226] sm:$0xff] %v398
        $region44: #{tpu_custom_call.1} parent=27 // pred_fallthru
          _
        %s400 = sand.u32 %s107, 1
        %s401 = scalar_lea.sflag [#allocation7], %s400
        %s402 = sand.u32 %s107, 1
        %s403 = smul.addr %s402, 8
        %s404 = scalar_lea.vmem [#allocation10], %s403
        // Predicated region
        $region45: #{tpu_custom_call.1} parent=27 // pred_check
          %p405 = pneg %p117
        $region46: #{tpu_custom_call.1} parent=27 // pred_check_branch
          %407 = sbr.rel (%p405) target = $region48
        $region47: #{tpu_custom_call.1} parent=27 // pred_region
          %s409 = ssub.s32 128, 128
          %410 = vsyncadd %s401, %s409
          %s411 = sadd.s32 %s28, %s27
          %s412 = smul.addr %s411, 128
          %s413 = scalar_lea.hbm %s2, %s412
          %s415 = sshll.u32 %s404, 4
          %s416 = int_to_ptr.vmem [resolvable:$true] %s415
          %418 = dma.vmem_to_hbm [thread:$0]  %s416, 128, %s413, %s401
        $region48: #{tpu_custom_call.1} parent=27 // pred_fallthru
          _
      $region28: #{tpu_custom_call.1} parent=5 // pred_fallthru
        _
      %p419 = scmp.le.s32.totalorder 2, %s17
      // Predicated region
      $region49: #{tpu_custom_call.1} parent=5 // pred_check
        %p420 = pneg %p419
      $region50: #{tpu_custom_call.1} parent=5 // pred_check_branch
        %422 = sbr.rel (%p420) target = $region52
      $region51: #{tpu_custom_call.1} parent=5 // pred_region
        %s423 = ssub.s32 %s17, 2
        // Predicated region
        $region53: #{tpu_custom_call.1} parent=51 // pred_check
          %p424 = pneg %p123
        $region54: #{tpu_custom_call.1} parent=51 // pred_check_branch
          %426 = sbr.rel (%p424) target = $region56
        $region55: #{tpu_custom_call.1} parent=51 // pred_region
          %s427 = sand.u32 %s108, 1
          %s428 = scalar_lea.sflag [#allocation7], %s427
          %s429 = sand.u32 %s108, 1
          %s430 = smul.addr %s429, 8
          %s431 = scalar_lea.vmem [#allocation10], %s430
          %432 = dma.done %s428, 128
        $region56: #{tpu_custom_call.1} parent=51 // pred_fallthru
          _
      $region52: #{tpu_custom_call.1} parent=5 // pred_fallthru
        _
    $region6: #{tpu_custom_call.1} parent=1 // loop_footer
      %s21 = sadd.s32 1, %s17
    $region7: #{tpu_custom_call.1} parent=1 // loop_footer_branch
      %16 = sbr.rel target = $region3
    $region8: #{tpu_custom_call.1} parent=1 // loop_exit
      _
    %433 = vsyncpa [#allocation6], 1
    %s434 = scalar_lea.sflag [#allocation6], 1
    %435 = vsyncpa %s434, 1
    %436 = vsyncpa [#allocation9], 1
    %s437 = scalar_lea.sflag [#allocation9], 1
    %438 = vsyncpa %s437, 1
    %439 = vsyncpa [#allocation7], 1
    %s440 = scalar_lea.sflag [#allocation7], 1
    %441 = vsyncpa %s440, 1

</llo_original>
